<compile_context>
chip_gen: v6e
topology: v6e:2x2x1
jax: 0.10.0
libtpu: 0.0.40
codegen_flags: <defaults>
</compile_context>

<pallas_src>
import jax
import jax.numpy as jnp
from jax.experimental import pallas as pl
from jax.experimental.pallas import tpu as pltpu


def _layer_condition_map_kernel(x_ref, w1_ref, b1_ref,
                                w2a_ref, b2a_ref, w2b_ref, b2b_ref,
                                oa_ref, ob_ref):
    # First Linear + ReLU (shared activation), then two half-width Linears so
    # the :H / H: split never leaves the kernel.
    x = x_ref[...]
    h = jnp.dot(x, w1_ref[...], preferred_element_type=jnp.float32) + b1_ref[...]
    h = jnp.maximum(h, 0.0)
    ya = jnp.dot(h, w2a_ref[...], preferred_element_type=jnp.float32) + b2a_ref[...]
    yb = jnp.dot(h, w2b_ref[...], preferred_element_type=jnp.float32) + b2b_ref[...]
    oa_ref[...] = ya.astype(oa_ref.dtype)
    ob_ref[...] = yb.astype(ob_ref.dtype)


def _round_up(n, m):
    return ((n + m - 1) // m) * m


def layer_condition_map(condition, w1, b1, w2, b2, hidden_features, *, tm=8192):
    """Pallas equivalent of LayerConditionMap.forward.

    condition: (B, 64) float32 (or bf16)
    w1: (64, 2H), b1: (1, 2H), w2: (2H, 2H), b2: (1, 2H)
    returns: tuple of two (B, H) arrays (condition's dtype).
    """
    B, K = condition.shape
    H = hidden_features
    H2 = 2 * H

    # Pre-split the second Linear (tiny, one-time) so the kernel emits the two
    # halves directly.
    w2a, w2b = w2[:, :H], w2[:, H:]
    b2a, b2b = b2[:, :H], b2[:, H:]

    # ---- batch tile ---------------------------------------------------------
    if B <= 8:
        tile = B  # single block equal to the full (possibly sub-8) batch dim
    else:
        tile = max(8, (tm // 8) * 8)
        # Keep >=2 grid steps so the "parallel" axis can shard across v7x's TCs.
        tile = min(tile, _round_up(pl.cdiv(B, 2), 8))
    grid = (pl.cdiv(B, tile),)  # ragged last block handled by Pallas clipping

    # ---- VMEM budget (explicit so large tiles also compile on v5e) ---------
    itemsize = jnp.dtype(condition.dtype).itemsize
    w_itemsize = jnp.dtype(w1.dtype).itemsize
    weight_bytes = (K * H2 + H2 + H2 * H2 + H2) * w_itemsize
    stream_bytes = tile * (K + H2) * itemsize        # x tile + both output tiles
    h_bytes = tile * H2 * 4                          # f32 intermediate activation
    vmem_limit = max(32 * 1024 * 1024,
                     2 * (stream_bytes + weight_bytes) + h_bytes + (8 << 20))

    # ---- cost hint ----------------------------------------------------------
    flops = 2 * B * H2 * (K + H2)
    bytes_accessed = B * (K + H2) * itemsize + weight_bytes
    cost = pl.CostEstimate(flops=flops, transcendentals=0,
                           bytes_accessed=bytes_accessed)

    resident = lambda arr: pl.BlockSpec(arr.shape, lambda i: (0, 0))

    out1, out2 = pl.pallas_call(
        _layer_condition_map_kernel,
        out_shape=(jax.ShapeDtypeStruct((B, H), condition.dtype),
                   jax.ShapeDtypeStruct((B, H), condition.dtype)),
        grid_spec=pltpu.PrefetchScalarGridSpec(
            num_scalar_prefetch=0,
            grid=grid,
            in_specs=[
                pl.BlockSpec((tile, K), lambda i: (i, 0)),  # streamed x tiles
                resident(w1),                               # weights resident in VMEM
                resident(b1),
                resident(w2a),
                resident(b2a),
                resident(w2b),
                resident(b2b),
            ],
            out_specs=[
                pl.BlockSpec((tile, H), lambda i: (i, 0)),
                pl.BlockSpec((tile, H), lambda i: (i, 0)),
            ],
        ),
        compiler_params=pltpu.CompilerParams(
            dimension_semantics=("parallel",),
            vmem_limit_bytes=int(vmem_limit),
        ),
        cost_estimate=cost,
    )(condition, w1, b1, w2a, b2a, w2b, b2b)

    return out1, out2


def init_params(key, hidden_features):
    """Deterministic synthetic init matching nn.Linear shapes.

    PyTorch stores Linear weight as (out, in); we keep the transposed
    (in, out) layout so the kernel computes x @ W directly.
    """
    k1, k2, k3, k4 = jax.random.split(key, 4)
    in1, out1 = 64, 2 * hidden_features
    in2, out2 = 2 * hidden_features, 2 * hidden_features
    w1 = jax.random.normal(k1, (in1, out1), jnp.float32) * (1.0 / jnp.sqrt(in1))
    b1 = jax.random.normal(k2, (1, out1), jnp.float32) * 0.01
    w2 = jax.random.normal(k3, (in2, out2), jnp.float32) * (1.0 / jnp.sqrt(in2))
    b2 = jax.random.normal(k4, (1, out2), jnp.float32) * 0.01
    return w1, b1, w2, b2


def reference(condition, w1, b1, w2, b2, hidden_features):
    h = jnp.maximum(condition @ w1 + b1, 0.0)
    y = h @ w2 + b2
    return y[:, :hidden_features], y[:, hidden_features:]


if __name__ == "__main__":
    hidden_features = 32
    batch = 8

    key = jax.random.PRNGKey(0)
    k_cond, k_params = jax.random.split(key)
    condition = jax.random.normal(k_cond, (batch, 64), jnp.float32)
    w1, b1, w2, b2 = init_params(k_params, hidden_features)

    out1, out2 = layer_condition_map(condition, w1, b1, w2, b2, hidden_features)
    jax.block_until_ready((out1, out2))

    ref1, ref2 = reference(condition, w1, b1, w2, b2, hidden_features)
    assert out1.shape == (batch, hidden_features)
    assert out2.shape == (batch, hidden_features)
    assert jnp.allclose(out1, ref1, atol=1e-5, rtol=1e-5)
    assert jnp.allclose(out2, ref2, atol=1e-5, rtol=1e-5)

    # Ragged batch (2050 rows, tile 512 -> 5 grid steps, last block partial):
    # verifies Pallas edge-block clipping without any jnp.pad / y[:B] copies.
    big_cond = jax.random.normal(jax.random.PRNGKey(1), (2050, 64), jnp.float32)
    b_out1, b_out2 = layer_condition_map(big_cond, w1, b1, w2, b2,
                                         hidden_features, tm=512)
    jax.block_until_ready((b_out1, b_out2))
    b_ref1, b_ref2 = reference(big_cond, w1, b1, w2, b2, hidden_features)
    assert jnp.allclose(b_out1, b_ref1, atol=1e-4, rtol=1e-4)
    assert jnp.allclose(b_out2, b_ref2, atol=1e-4, rtol=1e-4)

    # Default (large-tile) path on the same ragged batch: ceil(B/2)-capped tile
    # -> 2 grid steps, exercising the megacore-friendly configuration.
    d_out1, d_out2 = layer_condition_map(big_cond, w1, b1, w2, b2,
                                         hidden_features)
    jax.block_until_ready((d_out1, d_out2))
    assert jnp.allclose(d_out1, b_ref1, atol=1e-4, rtol=1e-4)
    assert jnp.allclose(d_out2, b_ref2, atol=1e-4, rtol=1e-4)

    print("KERNEL_OK")
</pallas_src>

<mosaic_0001>
module attributes {stable_mosaic.version = 11 : i64} {
  func.func @_layer_condition_map_kernel(%arg0: i32, %arg1: memref<8x64xf32, #tpu.memory_space<vmem>>, %arg2: memref<64x64xf32, #tpu.memory_space<vmem>>, %arg3: memref<1x64xf32, #tpu.memory_space<vmem>>, %arg4: memref<64x32xf32, #tpu.memory_space<vmem>>, %arg5: memref<1x32xf32, #tpu.memory_space<vmem>>, %arg6: memref<64x32xf32, #tpu.memory_space<vmem>>, %arg7: memref<1x32xf32, #tpu.memory_space<vmem>>, %arg8: memref<8x32xf32, #tpu.memory_space<vmem>>, %arg9: memref<8x32xf32, #tpu.memory_space<vmem>>) attributes {dimension_semantics = [#tpu.dimension_semantics<parallel>], iteration_bounds = array<i64: 1>, scalar_prefetch = 0 : i64, scratch_operands = 0 : i64, tpu.core_type = #tpu.core_type<tc>, window_params = [{transform_indices = @transform_0, window_bounds = array<i64: 8, 64>}, {pipeline_mode = #tpu.pipeline_mode<synchronous>, transform_indices = @transform_1, window_bounds = array<i64: 64, 64>}, {pipeline_mode = #tpu.pipeline_mode<synchronous>, transform_indices = @transform_2, window_bounds = array<i64: 1, 64>}, {pipeline_mode = #tpu.pipeline_mode<synchronous>, transform_indices = @transform_3, window_bounds = array<i64: 64, 32>}, {pipeline_mode = #tpu.pipeline_mode<synchronous>, transform_indices = @transform_4, window_bounds = array<i64: 1, 32>}, {pipeline_mode = #tpu.pipeline_mode<synchronous>, transform_indices = @transform_5, window_bounds = array<i64: 64, 32>}, {pipeline_mode = #tpu.pipeline_mode<synchronous>, transform_indices = @transform_6, window_bounds = array<i64: 1, 32>}, {transform_indices = @transform_7, window_bounds = array<i64: 8, 32>}, {transform_indices = @transform_8, window_bounds = array<i64: 8, 32>}]} {
    %c0 = arith.constant 0 : index
    %c0_0 = arith.constant 0 : index
    %0 = vector.load %arg1[%c0, %c0_0] : memref<8x64xf32, #tpu.memory_space<vmem>>, vector<8x64xf32>
    %c0_1 = arith.constant 0 : index
    %c0_2 = arith.constant 0 : index
    %1 = vector.load %arg2[%c0_1, %c0_2] : memref<64x64xf32, #tpu.memory_space<vmem>>, vector<64x64xf32>
    %cst = arith.constant dense<0.000000e+00> : vector<8x64xf32>
    %2 = tpu.matmul %0, %1, %cst {dimension_numbers = #tpu.dot_dimension_numbers<[1], [0], [0], [1], [0, 0, 1, 1], [], []>} : vector<8x64xf32>, vector<64x64xf32>, vector<8x64xf32> -> vector<8x64xf32>
    %c0_3 = arith.constant 0 : index
    %c0_4 = arith.constant 0 : index
    %3 = vector.load %arg3[%c0_3, %c0_4] : memref<1x64xf32, #tpu.memory_space<vmem>>, vector<1x64xf32>
    %4 = vector.broadcast %3 : vector<1x64xf32> to vector<8x64xf32>
    %5 = arith.addf %2, %4 : vector<8x64xf32>
    %cst_5 = arith.constant 0.000000e+00 : f32
    %6 = vector.broadcast %cst_5 : f32 to vector<8x64xf32>
    %7 = arith.maximumf %5, %6 : vector<8x64xf32>
    %c0_6 = arith.constant 0 : index
    %c0_7 = arith.constant 0 : index
    %8 = vector.load %arg4[%c0_6, %c0_7] : memref<64x32xf32, #tpu.memory_space<vmem>>, vector<64x32xf32>
    %cst_8 = arith.constant dense<0.000000e+00> : vector<8x32xf32>
    %9 = tpu.matmul %7, %8, %cst_8 {dimension_numbers = #tpu.dot_dimension_numbers<[1], [0], [0], [1], [0, 0, 1, 1], [], []>} : vector<8x64xf32>, vector<64x32xf32>, vector<8x32xf32> -> vector<8x32xf32>
    %c0_9 = arith.constant 0 : index
    %c0_10 = arith.constant 0 : index
    %10 = vector.load %arg5[%c0_9, %c0_10] : memref<1x32xf32, #tpu.memory_space<vmem>>, vector<1x32xf32>
    %11 = vector.broadcast %10 : vector<1x32xf32> to vector<8x32xf32>
    %12 = arith.addf %9, %11 : vector<8x32xf32>
    %c0_11 = arith.constant 0 : index
    %c0_12 = arith.constant 0 : index
    %13 = vector.load %arg6[%c0_11, %c0_12] : memref<64x32xf32, #tpu.memory_space<vmem>>, vector<64x32xf32>
    %cst_13 = arith.constant dense<0.000000e+00> : vector<8x32xf32>
    %14 = tpu.matmul %7, %13, %cst_13 {dimension_numbers = #tpu.dot_dimension_numbers<[1], [0], [0], [1], [0, 0, 1, 1], [], []>} : vector<8x64xf32>, vector<64x32xf32>, vector<8x32xf32> -> vector<8x32xf32>
    %c0_14 = arith.constant 0 : index
    %c0_15 = arith.constant 0 : index
    %15 = vector.load %arg7[%c0_14, %c0_15] : memref<1x32xf32, #tpu.memory_space<vmem>>, vector<1x32xf32>
    %16 = vector.broadcast %15 : vector<1x32xf32> to vector<8x32xf32>
    %17 = arith.addf %14, %16 : vector<8x32xf32>
    %c0_16 = arith.constant 0 : index
    %c0_17 = arith.constant 0 : index
    %18 = vector.load %arg8[%c0_16, %c0_17] : memref<8x32xf32, #tpu.memory_space<vmem>>, vector<8x32xf32>
    tpu.vector_store %arg8[%c0_16, %c0_17], %12 {strides = array<i32>} : memref<8x32xf32, #tpu.memory_space<vmem>>, vector<8x32xf32>,
    %c0_18 = arith.constant 0 : index
    %c0_19 = arith.constant 0 : index
    %19 = vector.load %arg9[%c0_18, %c0_19] : memref<8x32xf32, #tpu.memory_space<vmem>>, vector<8x32xf32>
    tpu.vector_store %arg9[%c0_18, %c0_19], %17 {strides = array<i32>} : memref<8x32xf32, #tpu.memory_space<vmem>>, vector<8x32xf32>,
    return
  }
  func.func @transform_0(%arg0: i32) -> (i32, i32) {
    %c0_i32 = arith.constant 0 : i32
    %c0_i32_0 = arith.constant 0 : i32
    return %arg0, %c0_i32 : i32, i32
  }
  func.func @transform_1(%arg0: i32) -> (i32, i32) {
    %c0_i32 = arith.constant 0 : i32
    %c0_i32_0 = arith.constant 0 : i32
    %c0_i32_1 = arith.constant 0 : i32
    return %c0_i32, %c0_i32_0 : i32, i32
  }
  func.func @transform_2(%arg0: i32) -> (i32, i32) {
    %c0_i32 = arith.constant 0 : i32
    %c0_i32_0 = arith.constant 0 : i32
    %c0_i32_1 = arith.constant 0 : i32
    return %c0_i32, %c0_i32_0 : i32, i32
  }
  func.func @transform_3(%arg0: i32) -> (i32, i32) {
    %c0_i32 = arith.constant 0 : i32
    %c0_i32_0 = arith.constant 0 : i32
    %c0_i32_1 = arith.constant 0 : i32
    return %c0_i32, %c0_i32_0 : i32, i32
  }
  func.func @transform_4(%arg0: i32) -> (i32, i32) {
    %c0_i32 = arith.constant 0 : i32
    %c0_i32_0 = arith.constant 0 : i32
    %c0_i32_1 = arith.constant 0 : i32
    return %c0_i32, %c0_i32_0 : i32, i32
  }
  func.func @transform_5(%arg0: i32) -> (i32, i32) {
    %c0_i32 = arith.constant 0 : i32
    %c0_i32_0 = arith.constant 0 : i32
    %c0_i32_1 = arith.constant 0 : i32
    return %c0_i32, %c0_i32_0 : i32, i32
  }
  func.func @transform_6(%arg0: i32) -> (i32, i32) {
    %c0_i32 = arith.constant 0 : i32
    %c0_i32_0 = arith.constant 0 : i32
    %c0_i32_1 = arith.constant 0 : i32
    return %c0_i32, %c0_i32_0 : i32, i32
  }
  func.func @transform_7(%arg0: i32) -> (i32, i32) {
    %c0_i32 = arith.constant 0 : i32
    %c0_i32_0 = arith.constant 0 : i32
    return %arg0, %c0_i32 : i32, i32
  }
  func.func @transform_8(%arg0: i32) -> (i32, i32) {
    %c0_i32 = arith.constant 0 : i32
    %c0_i32_0 = arith.constant 0 : i32
    return %arg0, %c0_i32 : i32, i32
  }
}

</mosaic_0001>

<llo_original>
// kernel: tpu_custom_call.1
$region0: #{tpu_custom_call.1}
  #allocation0 [shape = 'u32[]', space=smem, size = 0x4, offset = 0x4, fixed_abs, tag = 'smem constant byte address 0x4 - core index']
  #allocation1 [shape = 'u32[144,128]{1,0:T(1,128)}', space=vmem, size = 0x12000, scoped, tag = 'internal scratch']
  %s0 = inlined_call_operand.vmem [shape: f32[8,64], index: 0, kind: input, shape index: {}]
  %s1 = inlined_call_operand.vmem [shape: f32[64,64], index: 1, kind: input, shape index: {}]
  %s2 = inlined_call_operand.vmem [shape: f32[1,64], index: 2, kind: input, shape index: {}]
  %s3 = inlined_call_operand.vmem [shape: f32[64,32], index: 3, kind: input, shape index: {}]
  %s4 = inlined_call_operand.vmem [shape: f32[1,32], index: 4, kind: input, shape index: {}]
  %s5 = inlined_call_operand.vmem [shape: f32[64,32], index: 5, kind: input, shape index: {}]
  %s6 = inlined_call_operand.vmem [shape: f32[1,32], index: 6, kind: input, shape index: {}]
  %s7 = inlined_call_operand.hbm [shape: f32[8,32], index: 7, kind: output, shape index: {0}]
  %s8 = inlined_call_operand.hbm [shape: f32[8,32], index: 8, kind: output, shape index: {1}]
  %9 = xla_tuple %s7, %s8
  %s10 = sld [smem:[#allocation0]]
  $region46: #{tpu_custom_call.1} parent=0
    _
  %s12 = ssub.s32 1, %s10
  %s13 = scalar_select 0, %s12, %s10
  $region1: #{tpu_custom_call.1} parent=0
    #allocation2 [shape = 'u8[4096]{0}', space=vmem, size = 0x1000, scoped, tag = 'output window, operand 0, single buffered']
    #allocation3 [shape = 's32[1]{0}', space=sflag, size = 0x4, scoped, tag = 'scoped memory for tpu_custom_call.1']
    #allocation4 [shape = 'u8[4096]{0}', space=vmem, size = 0x1000, scoped, tag = 'output window, operand 1, single buffered']
    #allocation5 [shape = 's32[1]{0}', space=sflag, size = 0x4, scoped, tag = 'scoped memory for tpu_custom_call.1']
    %14 = vsyncpa [#allocation3], 0
    %15 = vsyncpa [#allocation5], 0
    // Predicated region
    $region2: #{tpu_custom_call.1} parent=1 // pred_check
      _
    $region3: #{tpu_custom_call.1} parent=1 // pred_check_branch
      %17 = sbr.rel (0) target = $region5
    $region4: #{tpu_custom_call.1} parent=1 // pred_region
      _
    $region5: #{tpu_custom_call.1} parent=1 // pred_fallthru
      _
    // Predicated region
    $region6: #{tpu_custom_call.1} parent=1 // pred_check
      _
    $region7: #{tpu_custom_call.1} parent=1 // pred_check_branch
      %19 = sbr.rel (0) target = $region9
    $region8: #{tpu_custom_call.1} parent=1 // pred_region
      _
    $region9: #{tpu_custom_call.1} parent=1 // pred_fallthru
      _
    // Predicated region
    $region10: #{tpu_custom_call.1} parent=1 // pred_check
      _
    $region11: #{tpu_custom_call.1} parent=1 // pred_check_branch
      %21 = sbr.rel (0) target = $region13
    $region12: #{tpu_custom_call.1} parent=1 // pred_region
      _
    $region13: #{tpu_custom_call.1} parent=1 // pred_fallthru
      _
    // Predicated region
    $region14: #{tpu_custom_call.1} parent=1 // pred_check
      _
    $region15: #{tpu_custom_call.1} parent=1 // pred_check_branch
      %23 = sbr.rel (0) target = $region17
    $region16: #{tpu_custom_call.1} parent=1 // pred_region
      _
    $region17: #{tpu_custom_call.1} parent=1 // pred_fallthru
      _
    // Predicated region
    $region18: #{tpu_custom_call.1} parent=1 // pred_check
      _
    $region19: #{tpu_custom_call.1} parent=1 // pred_check_branch
      %25 = sbr.rel (0) target = $region21
    $region20: #{tpu_custom_call.1} parent=1 // pred_region
      _
    $region21: #{tpu_custom_call.1} parent=1 // pred_fallthru
      _
    // Predicated region
    $region22: #{tpu_custom_call.1} parent=1 // pred_check
      _
    $region23: #{tpu_custom_call.1} parent=1 // pred_check_branch
      %27 = sbr.rel (0) target = $region25
    $region24: #{tpu_custom_call.1} parent=1 // pred_region
      _
    $region25: #{tpu_custom_call.1} parent=1 // pred_fallthru
      _
    // Predicated region
    $region26: #{tpu_custom_call.1} parent=1 // pred_check
      _
    $region27: #{tpu_custom_call.1} parent=1 // pred_check_branch
      %29 = sbr.rel (0) target = $region29
    $region28: #{tpu_custom_call.1} parent=1 // pred_region
      _
    $region29: #{tpu_custom_call.1} parent=1 // pred_fallthru
      _
    %v30 = vld [vmem:[%s0] sm:$0xff]
    %v31 = vld [vmem:[%s1] sm:$0xff]
    %v32 = vld [vmem:[%s1 + $0x8] sm:$0xff]
    %v33 = vld [vmem:[%s1 + $0x10] sm:$0xff]
    %v34 = vld [vmem:[%s1 + $0x18] sm:$0xff]
    %v35 = vld [vmem:[%s1 + $0x20] sm:$0xff]
    %v36 = vld [vmem:[%s1 + $0x28] sm:$0xff]
    %v37 = vld [vmem:[%s1 + $0x30] sm:$0xff]
    %v38 = vld [vmem:[%s1 + $0x38] sm:$0xff]
    %v39 = vld [vmem:[%s2] sm:$0x1]
    %v41 = vlaneseq
    %v42 = vshrl.u32 %v41, 7
    %v43 = vsub.s32 0, %v42
    %v44 = vrot.slane %v39, %v43
    %vm46 = vcmask 523264
    %v48 = vsel %vm46, %v30, 0
    %50 = vmatprep.subr.mxu0 0.0
    %51 = vmatpush1.msra.mxu0 0.0
    %52 = vmatprep.subr.mxu0 0.0
    %53 = vmatpush1.msra.mxu0 0.0
    %54 = vmatprep.subr.mxu0 0.0
    %55 = vmatpush1.msra.mxu0 0.0
    %56 = vmatprep.subr.mxu0 0.0
    %57 = vmatpush1.msra.mxu0 0.0
    %58 = vmatprep.subr.mxu0 0.0
    %59 = vmatpush1.msra.mxu0 0.0
    %60 = vmatprep.subr.mxu0 0.0
    %61 = vmatpush1.msra.mxu0 0.0
    %62 = vmatprep.subr.mxu0 0.0
    %63 = vmatpush1.msra.mxu0 0.0
    %64 = vmatprep.subr.mxu0 0.0
    %65 = vmatpush1.msra.mxu0 0.0
    %66 = vmatprep.subr.mxu0 0.0
    %67 = vmatpush1.msra.mxu0 %v38
    %68 = vmatprep.subr.mxu0 0.0
    %69 = vmatpush1.msra.mxu0 %v37
    %70 = vmatprep.subr.mxu0 0.0
    %71 = vmatpush1.msra.mxu0 %v36
    %72 = vmatprep.subr.mxu0 0.0
    %73 = vmatpush1.msra.mxu0 %v35
    %74 = vmatprep.subr.mxu0 0.0
    %75 = vmatpush1.msra.mxu0 %v34
    %76 = vmatprep.subr.mxu0 0.0
    %77 = vmatpush1.msra.mxu0 %v33
    %78 = vmatprep.subr.mxu0 0.0
    %79 = vmatpush1.msra.mxu0 %v32
    %80 = vmatprep.subr.mxu0 0.0
    %81 = vmatpush1.msra.mxu0 %v31
    %82 = vmatprep.subr.mxu0 0.0
    %83 = vmatpush2.msra.mxu0 0.0
    %84 = vmatprep.subr.mxu0 0.0
    %85 = vmatpush2.msra.mxu0 0.0
    %86 = vmatprep.subr.mxu0 0.0
    %87 = vmatpush2.msra.mxu0 0.0
    %88 = vmatprep.subr.mxu0 0.0
    %89 = vmatpush2.msra.mxu0 0.0
    %90 = vmatprep.subr.mxu0 0.0
    %91 = vmatpush2.msra.mxu0 0.0
    %92 = vmatprep.subr.mxu0 0.0
    %93 = vmatpush2.msra.mxu0 0.0
    %94 = vmatprep.subr.mxu0 0.0
    %95 = vmatpush2.msra.mxu0 0.0
    %96 = vmatprep.subr.mxu0 0.0
    %97 = vmatpush2.msra.mxu0 0.0
    %98 = vmatprep.subr.mxu0 0.0
    %99 = vmatpush2.msra.mxu0 0.0
    %100 = vmatprep.subr.mxu0 0.0
    %101 = vmatpush2.msra.mxu0 0.0
    %102 = vmatprep.subr.mxu0 0.0
    %103 = vmatpush2.msra.mxu0 0.0
    %104 = vmatprep.subr.mxu0 0.0
    %105 = vmatpush2.msra.mxu0 0.0
    %106 = vmatprep.subr.mxu0 0.0
    %107 = vmatpush2.msra.mxu0 0.0
    %108 = vmatprep.subr.mxu0 0.0
    %109 = vmatpush2.msra.mxu0 0.0
    %110 = vmatprep.subr.mxu0 0.0
    %111 = vmatpush2.msra.mxu0 0.0
    %112 = vmatprep.subr.mxu0 0.0
    %113 = vmatpush2.msra.mxu0 0.0
    %114 = vmatprep.mubr.f32.mxu0 0.0
    %115 = vmatmul.mubr.f32.gmra.mxu0 %v48
    %v116 = vpop.f32.mrf.mxu0
    %v117 = vadd.f32 %v44, %v116
    %v118 = vpop.f32.mrf.mxu0
    %119 = vdwg.mxu0
    %v120 = vmax.f32 %v117, 0.0
    %v121 = vld [vmem:[%s3] sm:$0xff]
    %v122 = vld [vmem:[%s3 + $0x8] sm:$0xff]
    %v123 = vld [vmem:[%s3 + $0x10] sm:$0xff]
    %v124 = vld [vmem:[%s3 + $0x18] sm:$0xff]
    %v125 = vld [vmem:[%s3 + $0x20] sm:$0xff]
    %v126 = vld [vmem:[%s3 + $0x28] sm:$0xff]
    %v127 = vld [vmem:[%s3 + $0x30] sm:$0xff]
    %v128 = vld [vmem:[%s3 + $0x38] sm:$0xff]
    %v129 = vld [vmem:[%s4] sm:$0x1]
    %v131 = vlaneseq
    %v132 = vshrl.u32 %v131, 7
    %v133 = vsub.s32 0, %v132
    %v134 = vrot.slane %v129, %v133
    %v137 = vsel %vm46, %v120, 0
    %139 = vmatprep.subr.mxu0 0.0
    %140 = vmatpush1.msra.mxu0 0.0
    %141 = vmatprep.subr.mxu0 0.0
    %142 = vmatpush1.msra.mxu0 0.0
    %143 = vmatprep.subr.mxu0 0.0
    %144 = vmatpush1.msra.mxu0 0.0
    %145 = vmatprep.subr.mxu0 0.0
    %146 = vmatpush1.msra.mxu0 0.0
    %147 = vmatprep.subr.mxu0 0.0
    %148 = vmatpush1.msra.mxu0 0.0
    %149 = vmatprep.subr.mxu0 0.0
    %150 = vmatpush1.msra.mxu0 0.0
    %151 = vmatprep.subr.mxu0 0.0
    %152 = vmatpush1.msra.mxu0 0.0
    %153 = vmatprep.subr.mxu0 0.0
    %154 = vmatpush1.msra.mxu0 0.0
    %155 = vmatprep.subr.mxu0 0.0
    %156 = vmatpush1.msra.mxu0 %v128
    %157 = vmatprep.subr.mxu0 0.0
    %158 = vmatpush1.msra.mxu0 %v127
    %159 = vmatprep.subr.mxu0 0.0
    %160 = vmatpush1.msra.mxu0 %v126
    %161 = vmatprep.subr.mxu0 0.0
    %162 = vmatpush1.msra.mxu0 %v125
    %163 = vmatprep.subr.mxu0 0.0
    %164 = vmatpush1.msra.mxu0 %v124
    %165 = vmatprep.subr.mxu0 0.0
    %166 = vmatpush1.msra.mxu0 %v123
    %167 = vmatprep.subr.mxu0 0.0
    %168 = vmatpush1.msra.mxu0 %v122
    %169 = vmatprep.subr.mxu0 0.0
    %170 = vmatpush1.msra.mxu0 %v121
    %171 = vmatprep.subr.mxu0 0.0
    %172 = vmatpush2.msra.mxu0 0.0
    %173 = vmatprep.subr.mxu0 0.0
    %174 = vmatpush2.msra.mxu0 0.0
    %175 = vmatprep.subr.mxu0 0.0
    %176 = vmatpush2.msra.mxu0 0.0
    %177 = vmatprep.subr.mxu0 0.0
    %178 = vmatpush2.msra.mxu0 0.0
    %179 = vmatprep.subr.mxu0 0.0
    %180 = vmatpush2.msra.mxu0 0.0
    %181 = vmatprep.subr.mxu0 0.0
    %182 = vmatpush2.msra.mxu0 0.0
    %183 = vmatprep.subr.mxu0 0.0
    %184 = vmatpush2.msra.mxu0 0.0
    %185 = vmatprep.subr.mxu0 0.0
    %186 = vmatpush2.msra.mxu0 0.0
    %187 = vmatprep.subr.mxu0 0.0
    %188 = vmatpush2.msra.mxu0 0.0
    %189 = vmatprep.subr.mxu0 0.0
    %190 = vmatpush2.msra.mxu0 0.0
    %191 = vmatprep.subr.mxu0 0.0
    %192 = vmatpush2.msra.mxu0 0.0
    %193 = vmatprep.subr.mxu0 0.0
    %194 = vmatpush2.msra.mxu0 0.0
    %195 = vmatprep.subr.mxu0 0.0
    %196 = vmatpush2.msra.mxu0 0.0
    %197 = vmatprep.subr.mxu0 0.0
    %198 = vmatpush2.msra.mxu0 0.0
    %199 = vmatprep.subr.mxu0 0.0
    %200 = vmatpush2.msra.mxu0 0.0
    %201 = vmatprep.subr.mxu0 0.0
    %202 = vmatpush2.msra.mxu0 0.0
    %203 = vmatprep.mubr.f32.mxu0 0.0
    %204 = vmatmul.mubr.f32.gmra.mxu0 %v137
    %v205 = vpop.f32.mrf.mxu0
    %v206 = vadd.f32 %v134, %v205
    %v207 = vpop.f32.mrf.mxu0
    %208 = vdwg.mxu0
    %v209 = vld [vmem:[%s5] sm:$0xff]
    %v210 = vld [vmem:[%s5 + $0x8] sm:$0xff]
    %v211 = vld [vmem:[%s5 + $0x10] sm:$0xff]
    %v212 = vld [vmem:[%s5 + $0x18] sm:$0xff]
    %v213 = vld [vmem:[%s5 + $0x20] sm:$0xff]
    %v214 = vld [vmem:[%s5 + $0x28] sm:$0xff]
    %v215 = vld [vmem:[%s5 + $0x30] sm:$0xff]
    %v216 = vld [vmem:[%s5 + $0x38] sm:$0xff]
    %v217 = vld [vmem:[%s6] sm:$0x1]
    %v219 = vlaneseq
    %v220 = vshrl.u32 %v219, 7
    %v221 = vsub.s32 0, %v220
    %v222 = vrot.slane %v217, %v221
    %224 = vmatprep.subr.mxu0 0.0
    %225 = vmatpush1.msra.mxu0 0.0
    %226 = vmatprep.subr.mxu0 0.0
    %227 = vmatpush1.msra.mxu0 0.0
    %228 = vmatprep.subr.mxu0 0.0
    %229 = vmatpush1.msra.mxu0 0.0
    %230 = vmatprep.subr.mxu0 0.0
    %231 = vmatpush1.msra.mxu0 0.0
    %232 = vmatprep.subr.mxu0 0.0
    %233 = vmatpush1.msra.mxu0 0.0
    %234 = vmatprep.subr.mxu0 0.0
    %235 = vmatpush1.msra.mxu0 0.0
    %236 = vmatprep.subr.mxu0 0.0
    %237 = vmatpush1.msra.mxu0 0.0
    %238 = vmatprep.subr.mxu0 0.0
    %239 = vmatpush1.msra.mxu0 0.0
    %240 = vmatprep.subr.mxu0 0.0
    %241 = vmatpush1.msra.mxu0 %v216
    %242 = vmatprep.subr.mxu0 0.0
    %243 = vmatpush1.msra.mxu0 %v215
    %244 = vmatprep.subr.mxu0 0.0
    %245 = vmatpush1.msra.mxu0 %v214
    %246 = vmatprep.subr.mxu0 0.0
    %247 = vmatpush1.msra.mxu0 %v213
    %248 = vmatprep.subr.mxu0 0.0
    %249 = vmatpush1.msra.mxu0 %v212
    %250 = vmatprep.subr.mxu0 0.0
    %251 = vmatpush1.msra.mxu0 %v211
    %252 = vmatprep.subr.mxu0 0.0
    %253 = vmatpush1.msra.mxu0 %v210
    %254 = vmatprep.subr.mxu0 0.0
    %255 = vmatpush1.msra.mxu0 %v209
    %256 = vmatprep.subr.mxu0 0.0
    %257 = vmatpush2.msra.mxu0 0.0
    %258 = vmatprep.subr.mxu0 0.0
    %259 = vmatpush2.msra.mxu0 0.0
    %260 = vmatprep.subr.mxu0 0.0
    %261 = vmatpush2.msra.mxu0 0.0
    %262 = vmatprep.subr.mxu0 0.0
    %263 = vmatpush2.msra.mxu0 0.0
    %264 = vmatprep.subr.mxu0 0.0
    %265 = vmatpush2.msra.mxu0 0.0
    %266 = vmatprep.subr.mxu0 0.0
    %267 = vmatpush2.msra.mxu0 0.0
    %268 = vmatprep.subr.mxu0 0.0
    %269 = vmatpush2.msra.mxu0 0.0
    %270 = vmatprep.subr.mxu0 0.0
    %271 = vmatpush2.msra.mxu0 0.0
    %272 = vmatprep.subr.mxu0 0.0
    %273 = vmatpush2.msra.mxu0 0.0
    %274 = vmatprep.subr.mxu0 0.0
    %275 = vmatpush2.msra.mxu0 0.0
    %276 = vmatprep.subr.mxu0 0.0
    %277 = vmatpush2.msra.mxu0 0.0
    %278 = vmatprep.subr.mxu0 0.0
    %279 = vmatpush2.msra.mxu0 0.0
    %280 = vmatprep.subr.mxu0 0.0
    %281 = vmatpush2.msra.mxu0 0.0
    %282 = vmatprep.subr.mxu0 0.0
    %283 = vmatpush2.msra.mxu0 0.0
    %284 = vmatprep.subr.mxu0 0.0
    %285 = vmatpush2.msra.mxu0 0.0
    %286 = vmatprep.subr.mxu0 0.0
    %287 = vmatpush2.msra.mxu0 0.0
    %288 = vmatprep.mubr.f32.mxu0 0.0
    %289 = vmatmul.mubr.f32.gmra.mxu0 %v137
    %v290 = vpop.f32.mrf.mxu0
    %v291 = vadd.f32 %v222, %v290
    %v292 = vpop.f32.mrf.mxu0
    %293 = vdwg.mxu0
    %vm294 = vcmask 261120
    %295 = vst.msk [vmem:[#allocation2] sm:$0xff] %vm294, %v206
    %296 = vst.msk [vmem:[#allocation4] sm:$0xff] %vm294, %v291
    // Predicated region
    $region30: #{tpu_custom_call.1} parent=1 // pred_check
      _
    $region31: #{tpu_custom_call.1} parent=1 // pred_check_branch
      %298 = sbr.rel (0) target = $region33
    $region32: #{tpu_custom_call.1} parent=1 // pred_region
      %s300 = ssub.s32 128, 128
      %301 = vsyncadd [#allocation3], %s300
      %s303 = sshll.u32 [#allocation2], 4
      %s304 = int_to_ptr.vmem [resolvable:$true] %s303
      %306 = dma.vmem_to_hbm [thread:$0]  %s304, 128, %s7, [#allocation3]
    $region33: #{tpu_custom_call.1} parent=1 // pred_fallthru
      _
    // Predicated region
    $region34: #{tpu_custom_call.1} parent=1 // pred_check
      _
    $region35: #{tpu_custom_call.1} parent=1 // pred_check_branch
      %308 = sbr.rel (0) target = $region37
    $region36: #{tpu_custom_call.1} parent=1 // pred_region
      %s310 = ssub.s32 128, 128
      %311 = vsyncadd [#allocation5], %s310
      %s313 = sshll.u32 [#allocation4], 4
      %s314 = int_to_ptr.vmem [resolvable:$true] %s313
      %316 = dma.vmem_to_hbm [thread:$0]  %s314, 128, %s8, [#allocation5]
    $region37: #{tpu_custom_call.1} parent=1 // pred_fallthru
      _
    // Predicated region
    $region38: #{tpu_custom_call.1} parent=1 // pred_check
      _
    $region39: #{tpu_custom_call.1} parent=1 // pred_check_branch
      %318 = sbr.rel (0) target = $region41
    $region40: #{tpu_custom_call.1} parent=1 // pred_region
      %319 = dma.done [#allocation3], 128
    $region41: #{tpu_custom_call.1} parent=1 // pred_fallthru
      _
    // Predicated region
    $region42: #{tpu_custom_call.1} parent=1 // pred_check
      _
    $region43: #{tpu_custom_call.1} parent=1 // pred_check_branch
      %321 = sbr.rel (0) target = $region45
    $region44: #{tpu_custom_call.1} parent=1 // pred_region
      %322 = dma.done [#allocation5], 128
    $region45: #{tpu_custom_call.1} parent=1 // pred_fallthru
      _
    %323 = vsyncpa [#allocation3], 1
    %324 = vsyncpa [#allocation5], 1

</llo_original>
